<compile_context>
chip_gen: v6e
topology: v6e:2x2x1
jax: 0.10.0
libtpu: 0.0.40
codegen_flags: <defaults>
</compile_context>

<pallas_src>
import jax
import jax.numpy as jnp
import numpy as np
from jax.experimental import pallas as pl
from jax.experimental.pallas import tpu as pltpu


def _copy_kernel(x_ref, o_ref):
    # Full-tile copy: each grid step moves one (block_rows, block_cols) slab
    # HBM -> VMEM -> HBM via the auto-pipelined BlockSpec machinery.
    o_ref[...] = x_ref[...]


def unflatten3d(x, C=4, D=2, H=4, W=4):
    """Pallas equivalent of Unflatten3D.forward: (N, C*D*H*W) -> (N, C, D, H, W)."""
    N, F = x.shape
    assert F == C * D * H * W, f"feature dim {F} != C*D*H*W = {C * D * H * W}"

    LANE = 128                      # vreg lane width
    SUB = 8                         # vreg sublane count
    itemsize = np.dtype(x.dtype).itemsize
    target_tile_bytes = 4 * 1024 * 1024   # ~4 MiB per tile

    # --- Column (lane) blocking --------------------------------------------
    # Prefer the full feature dim (widest possible unmasked vst).  Only tile
    # the columns when a single 8-row slab of full-F would blow the tile
    # budget AND F can be split into 128-multiple chunks.
    if F % LANE != 0 or F * itemsize * SUB <= target_tile_bytes:
        block_cols = F              # full-dim block: always legal
    else:
        block_cols = LANE
        while (F % (block_cols * 2) == 0
               and block_cols * 2 * itemsize * SUB <= target_tile_bytes):
            block_cols *= 2

    # --- Row (sublane) blocking --------------------------------------------
    rows_budget = (target_tile_bytes // (block_cols * itemsize)) // SUB * SUB
    rows_budget = max(SUB, int(rows_budget))
    block_rows = N if N <= rows_budget else rows_budget   # full dim or 8-multiple

    grid = (int(pl.cdiv(N, block_rows)), int(pl.cdiv(F, block_cols)))

    out2d = pl.pallas_call(
        _copy_kernel,
        out_shape=jax.ShapeDtypeStruct((N, F), x.dtype),
        grid=grid,
        in_specs=[pl.BlockSpec((block_rows, block_cols), lambda i, j: (i, j))],
        out_specs=pl.BlockSpec((block_rows, block_cols), lambda i, j: (i, j)),
        compiler_params=pltpu.CompilerParams(
            dimension_semantics=("parallel", "parallel"),
            vmem_limit_bytes=32 * 1024 * 1024,
        ),
    )(x)

    # Metadata-only reshape to NCDHW.
    return out2d.reshape(N, C, D, H, W)


if __name__ == "__main__":
    # Small shapes consistent with the module: N=2, C=4, D=2, H=4, W=4.
    N, C, D, H, W = 2, 4, 2, 4, 4
    key = jax.random.PRNGKey(0)
    x = jax.random.normal(key, (N, C * D * H * W), dtype=jnp.float32)

    out = unflatten3d(x, C=C, D=D, H=H, W=W)
    out = jax.block_until_ready(out)

    # Correctness check against the reference semantics (torch .view == reshape).
    ref = x.reshape(N, C, D, H, W)
    assert out.shape == (N, C, D, H, W), out.shape
    assert out.dtype == x.dtype
    assert jnp.array_equal(out, ref), "Pallas unflatten mismatch vs reference reshape"

    print("KERNEL_OK")
</pallas_src>

<mosaic_0001>
module attributes {stable_mosaic.version = 11 : i64} {
  func.func @_copy_kernel(%arg0: i32, %arg1: i32, %arg2: memref<2x128xf32, #tpu.memory_space<vmem>>, %arg3: memref<2x128xf32, #tpu.memory_space<vmem>>) attributes {dimension_semantics = [#tpu.dimension_semantics<parallel>, #tpu.dimension_semantics<parallel>], iteration_bounds = array<i64: 1, 1>, scalar_prefetch = 0 : i64, scratch_operands = 0 : i64, tpu.core_type = #tpu.core_type<tc>, window_params = [{transform_indices = @transform_0, window_bounds = array<i64: 2, 128>}, {transform_indices = @transform_1, window_bounds = array<i64: 2, 128>}]} {
    %c0 = arith.constant 0 : index
    %c0_0 = arith.constant 0 : index
    %0 = vector.load %arg2[%c0, %c0_0] : memref<2x128xf32, #tpu.memory_space<vmem>>, vector<2x128xf32>
    %c0_1 = arith.constant 0 : index
    %c0_2 = arith.constant 0 : index
    %1 = vector.load %arg3[%c0_1, %c0_2] : memref<2x128xf32, #tpu.memory_space<vmem>>, vector<2x128xf32>
    tpu.vector_store %arg3[%c0_1, %c0_2], %0 {strides = array<i32>} : memref<2x128xf32, #tpu.memory_space<vmem>>, vector<2x128xf32>,
    return
  }
  func.func @transform_0(%arg0: i32, %arg1: i32) -> (i32, i32) {
    %c0_i32 = arith.constant 0 : i32
    return %arg0, %arg1 : i32, i32
  }
  func.func @transform_1(%arg0: i32, %arg1: i32) -> (i32, i32) {
    %c0_i32 = arith.constant 0 : i32
    return %arg0, %arg1 : i32, i32
  }
}

</mosaic_0001>

<llo_original>
// kernel: tpu_custom_call.1
$region0: #{tpu_custom_call.1}
  #allocation0 [shape = 'u32[]', space=smem, size = 0x4, offset = 0x4, fixed_abs, tag = 'smem constant byte address 0x4 - core index']
  #allocation1 [shape = 'u32[144,128]{1,0:T(1,128)}', space=vmem, size = 0x12000, scoped, tag = 'internal scratch']
  %s0 = inlined_call_operand.hbm [shape: f32[2,128], index: 0, kind: input, shape index: {}]
  %s1 = inlined_call_operand.hbm [shape: f32[2,128], index: 1, kind: output, shape index: {}]
  %s2 = sld [smem:[#allocation0]]
  $region18: #{tpu_custom_call.1} parent=0
    _
  %s4 = ssub.s32 1, %s2
  %s5 = scalar_select 0, %s4, %s2
  $region1: #{tpu_custom_call.1} parent=0
    #allocation2 [shape = 'u8[1024]{0}', space=vmem, size = 0x400, scoped, tag = 'input window, operand 0, single buffered']
    #allocation3 [shape = 's32[1]{0}', space=sflag, size = 0x4, scoped, tag = 'scoped memory for tpu_custom_call.1']
    #allocation4 [shape = 's32[1]{0}', space=sflag, size = 0x4, scoped, tag = 'scoped memory for tpu_custom_call.1']
    #allocation5 [shape = 'u8[1024]{0}', space=vmem, size = 0x400, scoped, tag = 'output window, operand 0, single buffered']
    %6 = vsyncpa [#allocation3], 0
    %7 = vsyncpa [#allocation4], 0
    // Predicated region
    $region2: #{tpu_custom_call.1} parent=1 // pred_check
      _
    $region3: #{tpu_custom_call.1} parent=1 // pred_check_branch
      %9 = sbr.rel (0) target = $region5
    $region4: #{tpu_custom_call.1} parent=1 // pred_region
      %s11 = ssub.s32 32, 32
      %12 = vsyncadd [#allocation3], %s11
      %s14 = sshll.u32 [#allocation2], 4
      %s15 = int_to_ptr.vmem [resolvable:$true] %s14
      %17 = dma.hbm_to_vmem [thread:$0]  %s0, 32, %s15, [#allocation3]
    $region5: #{tpu_custom_call.1} parent=1 // pred_fallthru
      _
    // Predicated region
    $region6: #{tpu_custom_call.1} parent=1 // pred_check
      _
    $region7: #{tpu_custom_call.1} parent=1 // pred_check_branch
      %19 = sbr.rel (0) target = $region9
    $region8: #{tpu_custom_call.1} parent=1 // pred_region
      %20 = dma.done [#allocation3], 32
    $region9: #{tpu_custom_call.1} parent=1 // pred_fallthru
      _
    %v21 = vld [vmem:[#allocation2] sm:$0x3]
    %22 = vst [vmem:[#allocation5] sm:$0x3] %v21
    // Predicated region
    $region10: #{tpu_custom_call.1} parent=1 // pred_check
      _
    $region11: #{tpu_custom_call.1} parent=1 // pred_check_branch
      %24 = sbr.rel (0) target = $region13
    $region12: #{tpu_custom_call.1} parent=1 // pred_region
      %s26 = ssub.s32 32, 32
      %27 = vsyncadd [#allocation4], %s26
      %s29 = sshll.u32 [#allocation5], 4
      %s30 = int_to_ptr.vmem [resolvable:$true] %s29
      %32 = dma.vmem_to_hbm [thread:$0]  %s30, 32, %s1, [#allocation4]
    $region13: #{tpu_custom_call.1} parent=1 // pred_fallthru
      _
    // Predicated region
    $region14: #{tpu_custom_call.1} parent=1 // pred_check
      _
    $region15: #{tpu_custom_call.1} parent=1 // pred_check_branch
      %34 = sbr.rel (0) target = $region17
    $region16: #{tpu_custom_call.1} parent=1 // pred_region
      %35 = dma.done [#allocation4], 32
    $region17: #{tpu_custom_call.1} parent=1 // pred_fallthru
      _
    %36 = vsyncpa [#allocation3], 1
    %37 = vsyncpa [#allocation4], 1

</llo_original>
